<compile_context>
chip_gen: v7x
topology: tpu7x:2x2x1
jax: 0.10.0
libtpu: 0.0.40
codegen_flags: <defaults>
</compile_context>

<pallas_src>
import jax
import jax.numpy as jnp
import numpy as np
from jax.experimental import pallas as pl
from jax.experimental.pallas import tpu as pltpu

LANE = 128                # pixels per lane row (hardware lane width)
DEFAULT_TILE_ROWS = 256   # 256 rows x 128 lanes x 4 B = 128 KiB per operand buffer


# ---------------------------------------------------------------------------
# Fused kernel: per-pixel affine map  out = ir * a_ir + vis * a_vis + beta
#   ir_ref / vis_ref / o_ref : (TILE_ROWS, 128) f32 VMEM tiles (lane-dense pixels)
#   coef_ref                 : (3,) f32 in SMEM  [a_ir, a_vis, beta]
# ---------------------------------------------------------------------------
def _fused_net3_kernel(coef_ref, ir_ref, vis_ref, o_ref):
    a_ir = coef_ref[0]
    a_vis = coef_ref[1]
    beta = coef_ref[2]
    o_ref[...] = ir_ref[...] * a_ir + vis_ref[...] * a_vis + beta


def _pick_tile_rows(rows):
    """Tile-row count: big tiles for big problems, >=2 grid steps when possible."""
    if rows >= 2 * DEFAULT_TILE_ROWS:
        return DEFAULT_TILE_ROWS
    # small problem: aim for ~2 grid steps (keeps both v7x TCs busy), sublane-aligned (x8)
    return max(8, 8 * ((rows + 15) // 16))


def fused_net3_pallas(ir_nhwc, vis_nhwc, coef):
    """Single-kernel Net3 forward. ir/vis: (B,H,W,1) f32. coef: (3,) f32."""
    B, H, W, Cin = ir_nhwc.shape
    assert Cin == 1, "algebraically-collapsed kernel assumes num_channels == 1"
    n_px = B * H * W

    rows = -(-n_px // LANE)                      # cdiv
    tile_rows = _pick_tile_rows(rows)
    rows_padded = tile_rows * (-(-rows // tile_rows))
    padded_px = rows_padded * LANE

    ir_flat = ir_nhwc.reshape(n_px)
    vis_flat = vis_nhwc.reshape(n_px)
    pad = padded_px - n_px
    if pad:
        ir_flat = jnp.pad(ir_flat, (0, pad))
        vis_flat = jnp.pad(vis_flat, (0, pad))
    ir2 = ir_flat.reshape(rows_padded, LANE)
    vis2 = vis_flat.reshape(rows_padded, LANE)

    grid = (rows_padded // tile_rows,)
    out = pl.pallas_call(
        _fused_net3_kernel,
        out_shape=jax.ShapeDtypeStruct((rows_padded, LANE), jnp.float32),
        grid_spec=pltpu.PrefetchScalarGridSpec(
            num_scalar_prefetch=0,
            grid=grid,
            in_specs=[
                pl.BlockSpec(memory_space=pltpu.MemorySpace.SMEM),   # coef (3,)
                pl.BlockSpec((tile_rows, LANE), lambda i: (i, 0)),   # ir tile
                pl.BlockSpec((tile_rows, LANE), lambda i: (i, 0)),   # vis tile
            ],
            out_specs=pl.BlockSpec((tile_rows, LANE), lambda i: (i, 0)),
        ),
        compiler_params=pltpu.CompilerParams(
            dimension_semantics=("parallel",),
        ),
        cost_estimate=pl.CostEstimate(
            flops=4 * padded_px,            # 2 mul + 2 add per pixel
            transcendentals=0,
            bytes_accessed=12 * padded_px,  # 2 f32 loads + 1 f32 store per pixel
        ),
    )(coef, ir2, vis2)

    return out.reshape(padded_px)[:n_px].reshape(B, H, W, 1)


# ---------------------------------------------------------------------------
# Parameter construction (deterministic, PyTorch-default-style uniform init)
# ---------------------------------------------------------------------------
def _conv1x1_params(key, cin, cout):
    kw, kb = jax.random.split(key)
    bound = 1.0 / np.sqrt(cin)
    w = jax.random.uniform(kw, (cin, cout), jnp.float32, -bound, bound)
    b = jax.random.uniform(kb, (cout,), jnp.float32, -bound, bound)
    return w, b


def make_net3_params(key, num_channels=1, base_filter=32):
    k1, k2, k3 = jax.random.split(key, 3)
    p = {}
    p["vis_enc_w"], p["vis_enc_b"] = _conv1x1_params(k1, num_channels, base_filter)
    p["ir_enc_w"], p["ir_enc_b"] = _conv1x1_params(k2, num_channels, base_filter)
    p["dec_w"], p["dec_b"] = _conv1x1_params(k3, base_filter * 2, num_channels)
    return p


def compose_coefficients(params):
    """Fold encoder Conv2d(1,32,1x1) + concat + decoder Conv2d(64,1,1x1) into 3 scalars.

    Valid while WTKan2d is identity and FuseNet3 is channel concatenation (see TODOs).
    """
    w_dec = params["dec_w"]               # (64, 1)
    c = params["ir_enc_w"].shape[1]       # 32
    a_ir = (params["ir_enc_w"] @ w_dec[:c]).reshape(())     # (1,32)@(32,1) -> scalar
    a_vis = (params["vis_enc_w"] @ w_dec[c:]).reshape(())
    beta = (params["ir_enc_b"] @ w_dec[:c]
            + params["vis_enc_b"] @ w_dec[c:]
            + params["dec_b"]).reshape(())
    return jnp.stack([a_ir, a_vis, beta]).astype(jnp.float32)


# ---------------------------------------------------------------------------
# Net3.forward (inference path)
# ---------------------------------------------------------------------------
def net3_forward(params, ir_nhwc, vis_nhwc, scale=1):
    # F.interpolate(ir, scale_factor=1) is the identity; permute pair cancels.
    coef = compose_coefficients(params)
    return fused_net3_pallas(ir_nhwc, vis_nhwc, coef)   # NHWC (B, H, W, num_channels)


def net3_forward_ref(params, ir_nhwc, vis_nhwc):
    """Pure-JAX reference through the un-collapsed path (encoders -> concat -> decoder)."""
    B, H, W, _ = ir_nhwc.shape
    ir_f = ir_nhwc.reshape(-1, ir_nhwc.shape[-1]) @ params["ir_enc_w"] + params["ir_enc_b"]
    vis_f = vis_nhwc.reshape(-1, vis_nhwc.shape[-1]) @ params["vis_enc_w"] + params["vis_enc_b"]
    fuse = jnp.concatenate([ir_f, vis_f], axis=-1)
    out = fuse @ params["dec_w"] + params["dec_b"]
    return out.reshape(B, H, W, -1)


if __name__ == "__main__":
    key = jax.random.PRNGKey(0)
    k_ir, k_vis, k_par = jax.random.split(key, 3)

    B, H, W, C_in = 2, 16, 16, 1  # NCHW (2,1,16,16) in PyTorch -> NHWC here
    ir = jax.random.normal(k_ir, (B, H, W, C_in), jnp.float32)
    vis = jax.random.normal(k_vis, (B, H, W, C_in), jnp.float32)

    params = make_net3_params(k_par, num_channels=C_in, base_filter=32)

    out = net3_forward(params, ir, vis)
    out = jax.block_until_ready(out)

    ref = jax.block_until_ready(net3_forward_ref(params, ir, vis))
    assert out.shape == (B, H, W, C_in), out.shape
    np.testing.assert_allclose(np.asarray(out), np.asarray(ref), rtol=1e-5, atol=1e-5)

    print("KERNEL_OK")
</pallas_src>

<mosaic_0001>
module attributes {stable_mosaic.version = 11 : i64} {
  func.func @_fused_net3_kernel(%arg0: i32, %arg1: memref<3xf32, #tpu.memory_space<smem>>, %arg2: memref<8x128xf32, #tpu.memory_space<vmem>>, %arg3: memref<8x128xf32, #tpu.memory_space<vmem>>, %arg4: memref<8x128xf32, #tpu.memory_space<vmem>>) attributes {dimension_semantics = [#tpu.dimension_semantics<parallel>], iteration_bounds = array<i64: 1>, scalar_prefetch = 0 : i64, scratch_operands = 0 : i64, tpu.core_type = #tpu.core_type<tc>, window_params = [{transform_indices = @transform_0, window_bounds = array<i64: 3>}, {transform_indices = @transform_1, window_bounds = array<i64: 8, 128>}, {transform_indices = @transform_2, window_bounds = array<i64: 8, 128>}, {transform_indices = @transform_3, window_bounds = array<i64: 8, 128>}]} {
    %c0 = arith.constant 0 : index
    %0 = memref.load %arg1[%c0] : memref<3xf32, #tpu.memory_space<smem>>
    %c1 = arith.constant 1 : index
    %1 = memref.load %arg1[%c1] : memref<3xf32, #tpu.memory_space<smem>>
    %c2 = arith.constant 2 : index
    %2 = memref.load %arg1[%c2] : memref<3xf32, #tpu.memory_space<smem>>
    %c0_0 = arith.constant 0 : index
    %c0_1 = arith.constant 0 : index
    %3 = vector.load %arg2[%c0_0, %c0_1] : memref<8x128xf32, #tpu.memory_space<vmem>>, vector<8x128xf32>
    %4 = vector.broadcast %0 : f32 to vector<8x128xf32>
    %5 = arith.mulf %3, %4 : vector<8x128xf32>
    %c0_2 = arith.constant 0 : index
    %c0_3 = arith.constant 0 : index
    %6 = vector.load %arg3[%c0_2, %c0_3] : memref<8x128xf32, #tpu.memory_space<vmem>>, vector<8x128xf32>
    %7 = vector.broadcast %1 : f32 to vector<8x128xf32>
    %8 = arith.mulf %6, %7 : vector<8x128xf32>
    %9 = arith.addf %5, %8 : vector<8x128xf32>
    %10 = vector.broadcast %2 : f32 to vector<8x128xf32>
    %11 = arith.addf %9, %10 : vector<8x128xf32>
    %c0_4 = arith.constant 0 : index
    %c0_5 = arith.constant 0 : index
    %12 = vector.load %arg4[%c0_4, %c0_5] : memref<8x128xf32, #tpu.memory_space<vmem>>, vector<8x128xf32>
    tpu.vector_store %arg4[%c0_4, %c0_5], %11 {strides = array<i32>} : memref<8x128xf32, #tpu.memory_space<vmem>>, vector<8x128xf32>,
    return
  }
  func.func @transform_0(%arg0: i32) -> i32 {
    %c0_i32 = arith.constant 0 : i32
    %c0_i32_0 = arith.constant 0 : i32
    return %c0_i32 : i32
  }
  func.func @transform_1(%arg0: i32) -> (i32, i32) {
    %c0_i32 = arith.constant 0 : i32
    %c0_i32_0 = arith.constant 0 : i32
    return %arg0, %c0_i32 : i32, i32
  }
  func.func @transform_2(%arg0: i32) -> (i32, i32) {
    %c0_i32 = arith.constant 0 : i32
    %c0_i32_0 = arith.constant 0 : i32
    return %arg0, %c0_i32 : i32, i32
  }
  func.func @transform_3(%arg0: i32) -> (i32, i32) {
    %c0_i32 = arith.constant 0 : i32
    %c0_i32_0 = arith.constant 0 : i32
    return %arg0, %c0_i32 : i32, i32
  }
}

</mosaic_0001>

<llo_original>
// kernel: tpu_custom_call.1
$region0: #{tpu_custom_call.1}
  #allocation0 [shape = 'u32[]', space=smem, size = 0x4, offset = 0x4, fixed_abs, tag = 'smem constant byte address 0x4 - core index']
  #allocation1 [shape = 'u32[144,128]{1,0:T(1,128)}', space=vmem, size = 0x12000, scoped, tag = 'internal scratch']
  %s0 = inlined_call_operand.hbm [shape: f32[3], index: 0, kind: input, shape index: {}]
  %s1 = inlined_call_operand.hbm [shape: f32[8,128], index: 1, kind: input, shape index: {}]
  %s2 = inlined_call_operand.hbm [shape: f32[8,128], index: 2, kind: input, shape index: {}]
  %s3 = inlined_call_operand.hbm [shape: f32[8,128], index: 3, kind: output, shape index: {}]
  %s4 = sld [smem:[#allocation0]]
  $region34: #{tpu_custom_call.1} parent=0
    _
  %s6 = ssub.s32 1, %s4
  %s7 = scalar_select 0, %s6, %s4
  $region1: #{tpu_custom_call.1} parent=0
    #allocation2 [shape = 'u8[512]{0}', space=smem, size = 0x200, scoped, tag = 'input window, operand 0, single buffered']
    #allocation3 [shape = 's32[1]{0}', space=sflag, size = 0x4, scoped, tag = 'scoped memory for tpu_custom_call.1']
    #allocation4 [shape = 's32[1]{0}', space=sflag, size = 0x4, scoped, tag = 'scoped memory for tpu_custom_call.1']
    #allocation5 [shape = 's32[1]{0}', space=sflag, size = 0x4, scoped, tag = 'scoped memory for tpu_custom_call.1']
    #allocation6 [shape = 'u8[4096]{0}', space=vmem, size = 0x1000, scoped, tag = 'input window, operand 1, single buffered']
    #allocation7 [shape = 'u8[4096]{0}', space=vmem, size = 0x1000, scoped, tag = 'input window, operand 2, single buffered']
    #allocation8 [shape = 's32[1]{0}', space=sflag, size = 0x4, scoped, tag = 'scoped memory for tpu_custom_call.1']
    #allocation9 [shape = 'u8[4096]{0}', space=vmem, size = 0x1000, scoped, tag = 'output window, operand 0, single buffered']
    %8 = vsyncpa [#allocation5], 0
    %9 = vsyncpa [#allocation3], 0
    %10 = vsyncpa [#allocation8], 0
    %11 = vsyncpa [#allocation4], 0
    // Predicated region
    $region2: #{tpu_custom_call.1} parent=1 // pred_check
      _
    $region3: #{tpu_custom_call.1} parent=1 // pred_check_branch
      %13 = sbr.rel (0) target = $region5
    $region4: #{tpu_custom_call.1} parent=1 // pred_region
      %s15 = ssub.s32 16, 16
      %16 = vsyncadd [#allocation5], %s15
      %19 = dma.hbm_to_smem %s0, 16, [#allocation2], [#allocation5]
    $region5: #{tpu_custom_call.1} parent=1 // pred_fallthru
      _
    // Predicated region
    $region6: #{tpu_custom_call.1} parent=1 // pred_check
      _
    $region7: #{tpu_custom_call.1} parent=1 // pred_check_branch
      %21 = sbr.rel (0) target = $region9
    $region8: #{tpu_custom_call.1} parent=1 // pred_region
      %s23 = ssub.s32 128, 128
      %24 = vsyncadd [#allocation3], %s23
      %s26 = sshll.u32 [#allocation6], 4
      %s27 = int_to_ptr.vmem [resolvable:$true] %s26
      %29 = dma.hbm_to_vmem [thread:$0]  %s1, 128, %s27, [#allocation3]
    $region9: #{tpu_custom_call.1} parent=1 // pred_fallthru
      _
    // Predicated region
    $region10: #{tpu_custom_call.1} parent=1 // pred_check
      _
    $region11: #{tpu_custom_call.1} parent=1 // pred_check_branch
      %31 = sbr.rel (0) target = $region13
    $region12: #{tpu_custom_call.1} parent=1 // pred_region
      %s33 = ssub.s32 128, 128
      %34 = vsyncadd [#allocation8], %s33
      %s36 = sshll.u32 [#allocation7], 4
      %s37 = int_to_ptr.vmem [resolvable:$true] %s36
      %39 = dma.hbm_to_vmem [thread:$0]  %s2, 128, %s37, [#allocation8]
    $region13: #{tpu_custom_call.1} parent=1 // pred_fallthru
      _
    // Predicated region
    $region14: #{tpu_custom_call.1} parent=1 // pred_check
      _
    $region15: #{tpu_custom_call.1} parent=1 // pred_check_branch
      %41 = sbr.rel (0) target = $region17
    $region16: #{tpu_custom_call.1} parent=1 // pred_region
      %42 = dma.done [#allocation5], 16
    $region17: #{tpu_custom_call.1} parent=1 // pred_fallthru
      _
    // Predicated region
    $region18: #{tpu_custom_call.1} parent=1 // pred_check
      _
    $region19: #{tpu_custom_call.1} parent=1 // pred_check_branch
      %44 = sbr.rel (0) target = $region21
    $region20: #{tpu_custom_call.1} parent=1 // pred_region
      %45 = dma.done [#allocation3], 128
    $region21: #{tpu_custom_call.1} parent=1 // pred_fallthru
      _
    // Predicated region
    $region22: #{tpu_custom_call.1} parent=1 // pred_check
      _
    $region23: #{tpu_custom_call.1} parent=1 // pred_check_branch
      %47 = sbr.rel (0) target = $region25
    $region24: #{tpu_custom_call.1} parent=1 // pred_region
      %48 = dma.done [#allocation8], 128
    $region25: #{tpu_custom_call.1} parent=1 // pred_fallthru
      _
    %49 = sfence
    %s50 = sld [smem:[#allocation2]]
    %s51 = sld [smem:[#allocation2 + $0x1]]
    %s52 = sld [smem:[#allocation2 + $0x2]]
    %v53 = vld [vmem:[#allocation6] sm:$0xff]
    %v54 = vstv %s50
    %v55 = vmul.f32 %v53, %v54
    %v56 = vld [vmem:[#allocation7] sm:$0xff]
    %v57 = vstv %s51
    %v58 = vmul.f32 %v56, %v57
    %v59 = vadd.f32 %v55, %v58
    %v60 = vstv %s52
    %v61 = vadd.f32 %v59, %v60
    %62 = vst [vmem:[#allocation9] sm:$0xff] %v61
    // Predicated region
    $region26: #{tpu_custom_call.1} parent=1 // pred_check
      _
    $region27: #{tpu_custom_call.1} parent=1 // pred_check_branch
      %64 = sbr.rel (0) target = $region29
    $region28: #{tpu_custom_call.1} parent=1 // pred_region
      %s66 = ssub.s32 128, 128
      %67 = vsyncadd [#allocation4], %s66
      %s69 = sshll.u32 [#allocation9], 4
      %s70 = int_to_ptr.vmem [resolvable:$true] %s69
      %72 = dma.vmem_to_hbm [thread:$0]  %s70, 128, %s3, [#allocation4]
    $region29: #{tpu_custom_call.1} parent=1 // pred_fallthru
      _
    // Predicated region
    $region30: #{tpu_custom_call.1} parent=1 // pred_check
      _
    $region31: #{tpu_custom_call.1} parent=1 // pred_check_branch
      %74 = sbr.rel (0) target = $region33
    $region32: #{tpu_custom_call.1} parent=1 // pred_region
      %75 = dma.done [#allocation4], 128
    $region33: #{tpu_custom_call.1} parent=1 // pred_fallthru
      _
    %76 = vsyncpa [#allocation3], 1
    %77 = vsyncpa [#allocation8], 1
    %78 = vsyncpa [#allocation4], 1
    %79 = vsyncpa [#allocation5], 1

</llo_original>
